<compile_context>
chip_gen: v7x
topology: tpu7x:2x2x1
jax: 0.10.0
libtpu: 0.0.40
codegen_flags: <defaults>
</compile_context>

<pallas_src>
import jax
import jax.numpy as jnp
from jax.experimental import pallas as pl
from jax.experimental.pallas import tpu as pltpu

BN_EPS = 1e-5
CHANNEL_TILE = 8                      # sublane-aligned token-channel block
VMEM_LIMIT_BYTES = 32 * 1024 * 1024   # explicit scoped-VMEM budget (fits v5e/v6e/v7x)


def mlp_classifier_kernel(x_ref, w1_ref, lane_params_ref, gb_ref, b2_ref, out_ref):
    # x_ref:           (N, CT, D)   f32   one token-channel slab (ragged last block: OOB rows
    #                                     are garbage but confined to discarded channels)
    # w1_ref:          (D, D2)      bf16  pre-cast at init, resident across grid steps
    # lane_params_ref: (2, D2)      f32   row 0 = b1, row 1 = w2[:, 0]
    # gb_ref:          (CT, 2)      f32   col 0 = gamma, col 1 = beta (per-channel slab)
    # b2_ref:          (1,)         f32   SMEM scalar
    # out_ref:         (N, CT, 1)   f32
    N, CT, D = x_ref.shape
    D2 = w1_ref.shape[1]

    # --- Linear 1: single 2-D MXU matmul per slab, bf16 operands, f32 accumulation ---
    x2d = x_ref[...].reshape(N * CT, D)                                # layout-free (CT % 8 == 0)
    h2d = jnp.dot(x2d.astype(jnp.bfloat16), w1_ref[...],
                  preferred_element_type=jnp.float32)                  # (N*CT, D2) f32
    h2d = h2d + lane_params_ref[0:1, :]                                # + b1 (sublane bcast)
    h = h2d.reshape(N, CT, D2)                                         # layout-free view

    # --- BatchNorm1d(P) training-mode stats over (batch, feature), per channel ---
    count = jnp.float32(N * D2)
    mean = jnp.sum(h, axis=(0, 2), keepdims=True) / count              # (1, CT, 1)
    centered = h - mean
    var = jnp.sum(centered * centered, axis=(0, 2), keepdims=True) / count  # two-pass (safe)
    inv_std = jax.lax.rsqrt(var + BN_EPS)

    gamma = gb_ref[:, 0:1][None, :, :]                                 # (1, CT, 1)
    beta = gb_ref[:, 1:2][None, :, :]                                  # (1, CT, 1)
    hn = centered * (gamma * inv_std) + beta                           # single full-size pass

    # --- ReLU then Sigmoid (VPU/EUP, f32) ---
    a = jax.nn.sigmoid(jnp.maximum(hn, 0.0))

    # --- Classifier (D2 -> 1): VPU multiply + lane (XLU) reduction ---
    a2d = a.reshape(N * CT, D2)
    w2row = lane_params_ref[1:2, :]                                    # (1, D2)
    logits = jnp.sum(a2d * w2row, axis=1, keepdims=True) + b2_ref[0]   # (N*CT, 1)

    out_ref[...] = logits.reshape(N, CT, 1).astype(out_ref.dtype)


def pack_mlp_params(w1, b1, gamma, beta, w2, b2):
    """One-time packing of the static module parameters. Do NOT call per forward."""
    D, D2 = w1.shape
    P = gamma.reshape(-1).shape[0]
    assert w2.shape[1] == 1, "lane-reduce classifier path assumes output_size == 1"
    w1_bf16 = w1.astype(jnp.bfloat16)                                              # (D, D2)
    lane_params = jnp.concatenate(
        [jnp.reshape(b1, (1, D2)).astype(jnp.float32),
         jnp.reshape(w2[:, 0], (1, D2)).astype(jnp.float32)], axis=0)              # (2, D2)
    gb = jnp.concatenate(
        [jnp.reshape(gamma, (P, 1)), jnp.reshape(beta, (P, 1))], axis=1
    ).astype(jnp.float32)                                                          # (P, 2)
    b2s = jnp.reshape(b2, (1,)).astype(jnp.float32)                                # SMEM scalar
    return w1_bf16, lane_params, gb, b2s


def _vmem_footprint_bytes(N, D, D2):
    x_blk = 2 * N * CHANNEL_TILE * D * 4        # double-buffered f32 input slab
    w1_res = 2 * D * D2 * 2                     # resident bf16 weight (budget 2 buffers)
    out_blk = 2 * N * CHANNEL_TILE * 128 * 4    # (., ., 1) tiles lane-padded in VMEM
    interm = 4 * N * CHANNEL_TILE * D2 * 4      # h / centered / activation headroom
    return x_blk + w1_res + out_blk + interm + (64 << 10)


def mlp_classifier(x, packed_params):
    """x: (N, P, D) f32; packed_params from pack_mlp_params(). Returns (N, P, 1) f32."""
    w1_bf16, lane_params, gb, b2s = packed_params
    N, P, D = x.shape
    D2 = w1_bf16.shape[1]
    assert gb.shape[0] == P, "BatchNorm channel count must equal token count P"
    assert _vmem_footprint_bytes(N, D, D2) <= VMEM_LIMIT_BYTES, (
        "per-step VMEM footprint exceeds the configured limit; reduce N or raise the limit")

    n_blocks = pl.cdiv(P, CHANNEL_TILE)

    grid_spec = pltpu.PrefetchScalarGridSpec(
        num_scalar_prefetch=0,
        grid=(n_blocks,),
        in_specs=[
            pl.BlockSpec((N, CHANNEL_TILE, D), lambda c: (0, c, 0)),          # x channel slab
            pl.BlockSpec((D, D2), lambda c: (0, 0)),                          # w1 (resident)
            pl.BlockSpec((2, D2), lambda c: (0, 0)),                          # [b1; w2_col]
            pl.BlockSpec((CHANNEL_TILE, 2), lambda c: (c, 0)),                # [gamma | beta]
            pl.BlockSpec(memory_space=pltpu.MemorySpace.SMEM),                # b2 scalar
        ],
        out_specs=pl.BlockSpec((N, CHANNEL_TILE, 1), lambda c: (0, c, 0)),
    )

    cost = pl.CostEstimate(
        flops=2 * N * P * D * D2 + 2 * N * P * D2,
        transcendentals=N * P * D2,                      # sigmoid
        bytes_accessed=(x.size * 4 + w1_bf16.size * 2 + lane_params.size * 4
                        + gb.size * 4 + 4 + N * P * 4),
    )

    return pl.pallas_call(
        mlp_classifier_kernel,
        out_shape=jax.ShapeDtypeStruct((N, P, 1), jnp.float32),
        grid_spec=grid_spec,
        compiler_params=pltpu.CompilerParams(
            dimension_semantics=("parallel",),           # channel blocks are independent -> megacore
            vmem_limit_bytes=VMEM_LIMIT_BYTES,
        ),
        cost_estimate=cost,
    )(x, w1_bf16, lane_params, gb, b2s)


def reference(x, w1, b1, gamma, beta, w2, b2):
    h = jnp.einsum('npd,dk->npk', x, w1) + b1[None]
    mean = jnp.mean(h, axis=(0, 2), keepdims=True)
    var = jnp.mean((h - mean) ** 2, axis=(0, 2), keepdims=True)
    hn = (h - mean) * jax.lax.rsqrt(var + BN_EPS) * gamma[None] + beta[None]
    a = jax.nn.sigmoid(jnp.maximum(hn, 0.0))
    return jnp.einsum('npk,ko->npo', a, w2) + b2[None]


if __name__ == "__main__":
    # Small shapes consistent with the module: input_size=256, patch_num=8 -> P=9, output_size=1
    N, P, D, O = 4, 9, 256, 1
    D2 = D // 2

    key = jax.random.PRNGKey(0)
    kx, kw1, kb1, kg, kbt, kw2, kb2 = jax.random.split(key, 7)

    x = jax.random.normal(kx, (N, P, D), jnp.float32)
    w1 = jax.random.normal(kw1, (D, D2), jnp.float32) * 0.02      # Linear1 weight (transposed)
    b1 = jax.random.normal(kb1, (1, D2), jnp.float32) * 0.02      # Linear1 bias
    gamma = 1.0 + 0.1 * jax.random.normal(kg, (P, 1), jnp.float32)   # BatchNorm1d weight
    beta = 0.05 * jax.random.normal(kbt, (P, 1), jnp.float32)        # BatchNorm1d bias
    w2 = jax.random.normal(kw2, (D2, O), jnp.float32) * 0.02      # classifier weight
    b2 = jax.random.normal(kb2, (1, O), jnp.float32) * 0.02       # classifier bias

    # One-time parameter packing (hoisted out of the per-call path).
    packed = pack_mlp_params(w1, b1, gamma, beta, w2, b2)
    packed = jax.tree_util.tree_map(jax.block_until_ready, packed)

    run = jax.jit(mlp_classifier)
    out = jax.block_until_ready(run(x, packed))

    ref = reference(x, w1, b1, gamma, beta, w2, b2)
    assert out.shape == (N, P, O)
    # bf16 MXU operands (f32 accumulate) -> loosen tolerance slightly vs the all-f32 reference.
    assert jnp.allclose(out, ref, atol=1e-2, rtol=1e-2), "mismatch vs reference"

    print("KERNEL_OK")
</pallas_src>

<mosaic_0001>
module attributes {stable_mosaic.version = 11 : i64} {
  func.func @mlp_classifier_kernel(%arg0: i32, %arg1: memref<4x8x256xf32, #tpu.memory_space<vmem>>, %arg2: memref<256x128xbf16, #tpu.memory_space<vmem>>, %arg3: memref<2x128xf32, #tpu.memory_space<vmem>>, %arg4: memref<8x2xf32, #tpu.memory_space<vmem>>, %arg5: memref<1xf32, #tpu.memory_space<smem>>, %arg6: memref<4x8x1xf32, #tpu.memory_space<vmem>>) attributes {dimension_semantics = [#tpu.dimension_semantics<parallel>], iteration_bounds = array<i64: 2>, scalar_prefetch = 0 : i64, scratch_operands = 0 : i64, tpu.core_type = #tpu.core_type<tc>, window_params = [{transform_indices = @transform_0, window_bounds = array<i64: 4, 8, 256>}, {pipeline_mode = #tpu.pipeline_mode<synchronous>, transform_indices = @transform_1, window_bounds = array<i64: 256, 128>}, {pipeline_mode = #tpu.pipeline_mode<synchronous>, transform_indices = @transform_2, window_bounds = array<i64: 2, 128>}, {transform_indices = @transform_3, window_bounds = array<i64: 8, 2>}, {transform_indices = @transform_4, window_bounds = array<i64: 1>}, {transform_indices = @transform_5, window_bounds = array<i64: 4, 8, 1>}]} {
    %c0 = arith.constant 0 : index
    %c0_0 = arith.constant 0 : index
    %c0_1 = arith.constant 0 : index
    %0 = vector.load %arg1[%c0, %c0_0, %c0_1] : memref<4x8x256xf32, #tpu.memory_space<vmem>>, vector<4x8x256xf32>
    %1 = vector.shape_cast %0 : vector<4x8x256xf32> to vector<32x256xf32>
    %2 = arith.truncf %1 : vector<32x256xf32> to vector<32x256xbf16>
    %c0_2 = arith.constant 0 : index
    %c0_3 = arith.constant 0 : index
    %3 = vector.load %arg2[%c0_2, %c0_3] : memref<256x128xbf16, #tpu.memory_space<vmem>>, vector<256x128xbf16>
    %cst = arith.constant dense<0.000000e+00> : vector<32x128xf32>
    %4 = tpu.matmul %2, %3, %cst {dimension_numbers = #tpu.dot_dimension_numbers<[1], [0], [0], [1], [0, 0, 1, 1], [], []>} : vector<32x256xbf16>, vector<256x128xbf16>, vector<32x128xf32> -> vector<32x128xf32>
    %c0_4 = arith.constant 0 : index
    %c0_5 = arith.constant 0 : index
    %5 = vector.load %arg3[%c0_4, %c0_5] : memref<2x128xf32, #tpu.memory_space<vmem>>, vector<1x128xf32>
    %6 = vector.broadcast %5 : vector<1x128xf32> to vector<32x128xf32>
    %7 = arith.addf %4, %6 : vector<32x128xf32>
    %8 = vector.shape_cast %7 : vector<32x128xf32> to vector<4x8x128xf32>
    %cst_6 = arith.constant dense<0.000000e+00> : vector<8xf32>
    %9 = vector.multi_reduction <add>, %8, %cst_6 [0, 2] : vector<4x8x128xf32> to vector<8xf32>
    %10 = vector.shape_cast %9 : vector<8xf32> to vector<1x8x1xf32>
    %cst_7 = arith.constant 5.120000e+02 : f32
    %11 = vector.broadcast %cst_7 : f32 to vector<1x8x1xf32>
    %12 = arith.divf %10, %11 : vector<1x8x1xf32>
    %13 = vector.broadcast %12 : vector<1x8x1xf32> to vector<4x8x128xf32>
    %14 = arith.subf %8, %13 : vector<4x8x128xf32>
    %15 = arith.mulf %14, %14 : vector<4x8x128xf32>
    %cst_8 = arith.constant dense<0.000000e+00> : vector<8xf32>
    %16 = vector.multi_reduction <add>, %15, %cst_8 [0, 2] : vector<4x8x128xf32> to vector<8xf32>
    %17 = vector.shape_cast %16 : vector<8xf32> to vector<1x8x1xf32>
    %cst_9 = arith.constant 5.120000e+02 : f32
    %18 = vector.broadcast %cst_9 : f32 to vector<1x8x1xf32>
    %19 = arith.divf %17, %18 : vector<1x8x1xf32>
    %cst_10 = arith.constant 9.99999974E-6 : f32
    %20 = vector.broadcast %cst_10 : f32 to vector<1x8x1xf32>
    %21 = arith.addf %19, %20 : vector<1x8x1xf32>
    %22 = math.rsqrt %21 : vector<1x8x1xf32>
    %c0_11 = arith.constant 0 : index
    %c0_12 = arith.constant 0 : index
    %23 = vector.load %arg4[%c0_11, %c0_12] : memref<8x2xf32, #tpu.memory_space<vmem>>, vector<8x1xf32>
    %24 = vector.shape_cast %23 : vector<8x1xf32> to vector<1x8x1xf32>
    %c0_13 = arith.constant 0 : index
    %c1 = arith.constant 1 : index
    %25 = vector.load %arg4[%c0_13, %c1] : memref<8x2xf32, #tpu.memory_space<vmem>>, vector<8x1xf32>
    %26 = vector.shape_cast %25 : vector<8x1xf32> to vector<1x8x1xf32>
    %27 = arith.mulf %24, %22 : vector<1x8x1xf32>
    %28 = vector.broadcast %27 : vector<1x8x1xf32> to vector<4x8x128xf32>
    %29 = arith.mulf %14, %28 : vector<4x8x128xf32>
    %30 = vector.broadcast %26 : vector<1x8x1xf32> to vector<4x8x128xf32>
    %31 = arith.addf %29, %30 : vector<4x8x128xf32>
    %cst_14 = arith.constant 0.000000e+00 : f32
    %32 = vector.broadcast %cst_14 : f32 to vector<4x8x128xf32>
    %33 = arith.maximumf %31, %32 : vector<4x8x128xf32>
    %34 = arith.negf %33 : vector<4x8x128xf32>
    %35 = math.exp %34 : vector<4x8x128xf32>
    %cst_15 = arith.constant 1.000000e+00 : f32
    %36 = vector.broadcast %cst_15 : f32 to vector<4x8x128xf32>
    %37 = arith.addf %36, %35 : vector<4x8x128xf32>
    %38 = arith.divf %36, %37 : vector<4x8x128xf32>
    %39 = vector.shape_cast %38 : vector<4x8x128xf32> to vector<32x128xf32>
    %c1_16 = arith.constant 1 : index
    %c0_17 = arith.constant 0 : index
    %40 = vector.load %arg3[%c1_16, %c0_17] : memref<2x128xf32, #tpu.memory_space<vmem>>, vector<1x128xf32>
    %41 = vector.broadcast %40 : vector<1x128xf32> to vector<32x128xf32>
    %42 = arith.mulf %39, %41 : vector<32x128xf32>
    %cst_18 = arith.constant dense<0.000000e+00> : vector<32xf32>
    %43 = vector.multi_reduction <add>, %42, %cst_18 [1] : vector<32x128xf32> to vector<32xf32>
    %44 = vector.shape_cast %43 : vector<32xf32> to vector<32x1xf32>
    %c0_19 = arith.constant 0 : index
    %45 = memref.load %arg5[%c0_19] : memref<1xf32, #tpu.memory_space<smem>>
    %46 = vector.broadcast %45 : f32 to vector<32x1xf32>
    %47 = arith.addf %44, %46 : vector<32x1xf32>
    %48 = vector.shape_cast %47 : vector<32x1xf32> to vector<4x8x1xf32>
    %c0_20 = arith.constant 0 : index
    %c0_21 = arith.constant 0 : index
    %c0_22 = arith.constant 0 : index
    %49 = vector.load %arg6[%c0_20, %c0_21, %c0_22] : memref<4x8x1xf32, #tpu.memory_space<vmem>>, vector<4x8x1xf32>
    tpu.vector_store %arg6[%c0_20, %c0_21, %c0_22], %48 {strides = array<i32>} : memref<4x8x1xf32, #tpu.memory_space<vmem>>, vector<4x8x1xf32>,
    return
  }
  func.func @transform_0(%arg0: i32) -> (i32, i32, i32) {
    %c0_i32 = arith.constant 0 : i32
    %c0_i32_0 = arith.constant 0 : i32
    %c0_i32_1 = arith.constant 0 : i32
    return %c0_i32, %arg0, %c0_i32_0 : i32, i32, i32
  }
  func.func @transform_1(%arg0: i32) -> (i32, i32) {
    %c0_i32 = arith.constant 0 : i32
    %c0_i32_0 = arith.constant 0 : i32
    %c0_i32_1 = arith.constant 0 : i32
    return %c0_i32, %c0_i32_0 : i32, i32
  }
  func.func @transform_2(%arg0: i32) -> (i32, i32) {
    %c0_i32 = arith.constant 0 : i32
    %c0_i32_0 = arith.constant 0 : i32
    %c0_i32_1 = arith.constant 0 : i32
    return %c0_i32, %c0_i32_0 : i32, i32
  }
  func.func @transform_3(%arg0: i32) -> (i32, i32) {
    %c0_i32 = arith.constant 0 : i32
    %c0_i32_0 = arith.constant 0 : i32
    return %arg0, %c0_i32 : i32, i32
  }
  func.func @transform_4(%arg0: i32) -> i32 {
    %c0_i32 = arith.constant 0 : i32
    %c0_i32_0 = arith.constant 0 : i32
    return %c0_i32 : i32
  }
  func.func @transform_5(%arg0: i32) -> (i32, i32, i32) {
    %c0_i32 = arith.constant 0 : i32
    %c0_i32_0 = arith.constant 0 : i32
    %c0_i32_1 = arith.constant 0 : i32
    return %c0_i32, %arg0, %c0_i32_0 : i32, i32, i32
  }
}

</mosaic_0001>

<llo_original>
// kernel: mlp_classifier.1
$region0: #{mlp_classifier.1}
  #allocation0 [shape = 'u32[]', space=smem, size = 0x4, offset = 0x4, fixed_abs, tag = 'smem constant byte address 0x4 - core index']
  #allocation1 [shape = 'u32[144,128]{1,0:T(1,128)}', space=vmem, size = 0x12000, scoped, tag = 'internal scratch']
  #allocation2 [shape = 'f32[1]{0:T(128)S(6)}', space=smem, size = 0x200, scoped, tag = 'scoped memory for mlp_classifier.1']
  %s0 = inlined_call_operand.vmem [shape: f32[4,9,256], index: 0, kind: input, shape index: {}]
  %s1 = inlined_call_operand.vmem [shape: bf16[256,128], index: 1, kind: input, shape index: {}]
  %s2 = inlined_call_operand.vmem [shape: f32[2,128], index: 2, kind: input, shape index: {}]
  %s3 = inlined_call_operand.vmem [shape: f32[9,2], index: 3, kind: input, shape index: {}]
  %s4 = inlined_call_operand.<no memory space> [shape: f32[1], index: 4, kind: input, shape index: {}]
  %s5 = inlined_call_operand.vmem [shape: f32[4,9,1], index: 5, kind: output, shape index: {}]
  %s6 = sld [smem:[#allocation0]]
  $region110: #{mlp_classifier.1} parent=0
    _
  %s8 = ssub.s32 1, %s6
  %s9 = scalar_select 0, %s8, %s6
  %10 = sst [smem:[#allocation2]] %s4
  $region1: #{mlp_classifier.1} parent=0
    #allocation3 [shape = 'u8[65536]{0}', space=vmem, size = 0x10000, scoped, tag = 'input window, operand 0']
    #allocation4 [shape = 'u8[32768]{0}', space=vmem, size = 0x8000, scoped, tag = 'output window, operand 0']
    loop: start=0, step=1, limit=4
    $region2: #{mlp_classifier.1} parent=1 // loop_pre_header
      _
    $region3: #{mlp_classifier.1} parent=1 // loop_header
      %s12 = sphi 0, %s16
      %p13 = scmp.ge.s32.totalorder %s12, 4
      %s22 = sphi 0, %s24
      %s25 = sphi 0, %s22
      %s26 = sphi 0, %s25
      %s42 = sphi 0, %s26
      %s46 = sphi 0, %s46
      %s48 = sphi 0, %s46
      %s49 = sphi 0, %s48
      %s63 = sphi 0, %s49
      %s67 = sphi 0, %s67
      %s69 = sphi 0, %s67
      %s70 = sphi 0, %s69
      %s84 = sphi 0, %s70
      %s90 = sphi 0, %s92
      %s93 = sphi 0, %s90
      %s94 = sphi 0, %s93
      %s110 = sphi 0, %s94
      %s114 = sphi 0, %s114
      %s116 = sphi 0, %s114
      %s117 = sphi 0, %s116
      %s131 = sphi 0, %s117
      %s137 = sphi 0, %s139
      %s140 = sphi 0, %s137
      %s141 = sphi 0, %s140
      %s157 = sphi 0, %s141
    $region4: #{mlp_classifier.1} parent=1 // loop_header_branch
      %15 = sbr.rel (%p13) target = $region8
    $region5: #{mlp_classifier.1} parent=1 // loop_body
      %s17 = ssub.s32 %s12, 1
      %s18 = ssub.s32 %s12, 2
      %s19 = sadd.s32 %s12, 1
      %s20 = ssub.s32 %s12, %s19
      %p21 = scmp.eq.s32.totalorder %s20, 0
      %s23 = sadd.s32 %s22, 1
      %s24 = scalar_select %p21, %s22, %s23
      %p27 = pneg %p21
      %p28 = scmp.eq.s32.totalorder %s12, 1
      %p29 = por %p27, %p28
      %p30 = scmp.ne.s32.totalorder %s22, %s25
      %p31 = scmp.eq.s32.totalorder %s12, 0
      %p32 = por %p30, %p31
      %p33 = scmp.ne.s32.totalorder %s22, %s25
      %p34 = scmp.eq.s32.totalorder %s17, 1
      %p35 = por %p33, %p34
      %p36 = scmp.ne.s32.totalorder %s25, %s26
      %p37 = scmp.eq.s32.totalorder %s17, 0
      %p38 = por %p36, %p37
      %p39 = scmp.ne.s32.totalorder %s25, %s26
      %p40 = scmp.eq.s32.totalorder %s18, 1
      %p41 = por %p39, %p40
      %p43 = scmp.ne.s32.totalorder %s26, %s42
      %p44 = scmp.eq.s32.totalorder %s18, 0
      %p45 = por %p43, %p44
      %s47 = sadd.s32 %s46, 1
      %p50 = scmp.eq.s32.totalorder %s12, 1
      %p51 = scmp.ne.s32.totalorder %s46, %s48
      %p52 = scmp.eq.s32.totalorder %s12, 0
      %p53 = por %p51, %p52
      %p54 = scmp.ne.s32.totalorder %s46, %s48
      %p55 = scmp.eq.s32.totalorder %s17, 1
      %p56 = por %p54, %p55
      %p57 = scmp.ne.s32.totalorder %s48, %s49
      %p58 = scmp.eq.s32.totalorder %s17, 0
      %p59 = por %p57, %p58
      %p60 = scmp.ne.s32.totalorder %s48, %s49
      %p61 = scmp.eq.s32.totalorder %s18, 1
      %p62 = por %p60, %p61
      %p64 = scmp.ne.s32.totalorder %s49, %s63
      %p65 = scmp.eq.s32.totalorder %s18, 0
      %p66 = por %p64, %p65
      %s68 = sadd.s32 %s67, 1
      %p71 = scmp.eq.s32.totalorder %s12, 1
      %p72 = scmp.ne.s32.totalorder %s67, %s69
      %p73 = scmp.eq.s32.totalorder %s12, 0
      %p74 = por %p72, %p73
      %p75 = scmp.ne.s32.totalorder %s67, %s69
      %p76 = scmp.eq.s32.totalorder %s17, 1
      %p77 = por %p75, %p76
      %p78 = scmp.ne.s32.totalorder %s69, %s70
      %p79 = scmp.eq.s32.totalorder %s17, 0
      %p80 = por %p78, %p79
      %p81 = scmp.ne.s32.totalorder %s69, %s70
      %p82 = scmp.eq.s32.totalorder %s18, 1
      %p83 = por %p81, %p82
      %p85 = scmp.ne.s32.totalorder %s70, %s84
      %p86 = scmp.eq.s32.totalorder %s18, 0
      %p87 = por %p85, %p86
      %s88 = ssub.s32 %s12, %s19
      %p89 = scmp.eq.s32.totalorder %s88, 0
      %s91 = sadd.s32 %s90, 1
      %s92 = scalar_select %p89, %s90, %s91
      %p95 = pneg %p89
      %p96 = scmp.eq.s32.totalorder %s12, 1
      %p97 = por %p95, %p96
      %p98 = scmp.ne.s32.totalorder %s90, %s93
      %p99 = scmp.eq.s32.totalorder %s12, 0
      %p100 = por %p98, %p99
      %p101 = scmp.ne.s32.totalorder %s90, %s93
      %p102 = scmp.eq.s32.totalorder %s17, 1
      %p103 = por %p101, %p102
      %p104 = scmp.ne.s32.totalorder %s93, %s94
      %p105 = scmp.eq.s32.totalorder %s17, 0
      %p106 = por %p104, %p105
      %p107 = scmp.ne.s32.totalorder %s93, %s94
      %p108 = scmp.eq.s32.totalorder %s18, 1
      %p109 = por %p107, %p108
      %p111 = scmp.ne.s32.totalorder %s94, %s110
      %p112 = scmp.eq.s32.totalorder %s18, 0
      %p113 = por %p111, %p112
      %s115 = sadd.s32 %s114, 1
      %p118 = scmp.eq.s32.totalorder %s12, 1
      %p119 = scmp.ne.s32.totalorder %s114, %s116
      %p120 = scmp.eq.s32.totalorder %s12, 0
      %p121 = por %p119, %p120
      %p122 = scmp.ne.s32.totalorder %s114, %s116
      %p123 = scmp.eq.s32.totalorder %s17, 1
      %p124 = por %p122, %p123
      %p125 = scmp.ne.s32.totalorder %s116, %s117
      %p126 = scmp.eq.s32.totalorder %s17, 0
      %p127 = por %p125, %p126
      %p128 = scmp.ne.s32.totalorder %s116, %s117
      %p129 = scmp.eq.s32.totalorder %s18, 1
      %p130 = por %p128, %p129
      %p132 = scmp.ne.s32.totalorder %s117, %s131
      %p133 = scmp.eq.s32.totalorder %s18, 0
      %p134 = por %p132, %p133
      %s135 = ssub.s32 %s12, %s19
      %p136 = scmp.eq.s32.totalorder %s135, 0
      %s138 = sadd.s32 %s137, 1
      %s139 = scalar_select %p136, %s137, %s138
      %p142 = pneg %p136
      %p143 = scmp.eq.s32.totalorder %s12, 1
      %p144 = por %p142, %p143
      %p145 = scmp.ne.s32.totalorder %s137, %s140
      %p146 = scmp.eq.s32.totalorder %s12, 0
      %p147 = por %p145, %p146
      %p148 = scmp.ne.s32.totalorder %s137, %s140
      %p149 = scmp.eq.s32.totalorder %s17, 1
      %p150 = por %p148, %p149
      %p151 = scmp.ne.s32.totalorder %s140, %s141
      %p152 = scmp.eq.s32.totalorder %s17, 0
      %p153 = por %p151, %p152
      %p154 = scmp.ne.s32.totalorder %s140, %s141
      %p155 = scmp.eq.s32.totalorder %s18, 1
      %p156 = por %p154, %p155
      %p158 = scmp.ne.s32.totalorder %s141, %s157
      %p159 = scmp.eq.s32.totalorder %s18, 0
      %p160 = por %p158, %p159
      %p161 = scmp.le.s32.totalorder 1, %s12
      %p162 = scmp.lt.s32.totalorder %s12, 3
      %p163 = pnand %p161, %p162
      %p164 = pneg %p163
      // Predicated region
      $region9: #{mlp_classifier.1} parent=5 // pred_check
        _
      $region10: #{mlp_classifier.1} parent=5 // pred_check_branch
        %166 = sbr.rel (%p163) target = $region12
      $region11: #{mlp_classifier.1} parent=5 // pred_region
        %s167 = ssub.s32 %s12, 1
        // Predicated region
        $region13: #{mlp_classifier.1} parent=11 // pred_check
          %p168 = pneg %p59
        $region14: #{mlp_classifier.1} parent=11 // pred_check_branch
          %170 = sbr.rel (%p168) target = $region16
        $region15: #{mlp_classifier.1} parent=11 // pred_region
          _
        $region16: #{mlp_classifier.1} parent=11 // pred_fallthru
          _
        // Predicated region
        $region17: #{mlp_classifier.1} parent=11 // pred_check
          %p171 = pneg %p80
        $region18: #{mlp_classifier.1} parent=11 // pred_check_branch
          %173 = sbr.rel (%p171) target = $region20
        $region19: #{mlp_classifier.1} parent=11 // pred_region
          _
        $region20: #{mlp_classifier.1} parent=11 // pred_fallthru
          _
        // Predicated region
        $region21: #{mlp_classifier.1} parent=11 // pred_check
          %p174 = pneg %p127
        $region22: #{mlp_classifier.1} parent=11 // pred_check_branch
          %176 = sbr.rel (%p174) target = $region24
        $region23: #{mlp_classifier.1} parent=11 // pred_region
          _
        $region24: #{mlp_classifier.1} parent=11 // pred_fallthru
          _
      $region12: #{mlp_classifier.1} parent=5 // pred_fallthru
        _
      %p177 = scmp.lt.s32.totalorder %s12, 2
      // Predicated region
      $region25: #{mlp_classifier.1} parent=5 // pred_check
        %p178 = pneg %p177
      $region26: #{mlp_classifier.1} parent=5 // pred_check_branch
        %180 = sbr.rel (%p178) target = $region28
      $region27: #{mlp_classifier.1} parent=5 // pred_region
        // Predicated region
        $region29: #{mlp_classifier.1} parent=27 // pred_check
          %p181 = pneg %p32
        $region30: #{mlp_classifier.1} parent=27 // pred_check_branch
          %183 = sbr.rel (%p181) target = $region32
        $region31: #{mlp_classifier.1} parent=27 // pred_region
          %s184 = sand.u32 %s22, 1
          %s185 = sand.u32 %s22, 1
          %s186 = smul.addr %s185, 64
          %s187 = scalar_lea.vmem [#allocation3], %s186
          %s188 = smul.addr %s12, 2
          %s189 = smul.addr %s188, 8
          %s190 = scalar_lea.vmem %s0, %s189
          // Predicated region
          $region33: #{mlp_classifier.1} parent=31 // pred_check
            _
          $region34: #{mlp_classifier.1} parent=31 // pred_check_branch
            %192 = sbr.rel (0) target = $region36
          $region35: #{mlp_classifier.1} parent=31 // pred_region
            // Predicated region
            $region37: #{mlp_classifier.1} parent=35 // pred_check
              _
            $region38: #{mlp_classifier.1} parent=35 // pred_check_branch
              %194 = sbr.rel (0) target = $region40
            $region39: #{mlp_classifier.1} parent=35 // pred_region
              loop: start=0, step=1, limit=1
              $region41: #{mlp_classifier.1} parent=39 // loop_pre_header
                _
              $region42: #{mlp_classifier.1} parent=39 // loop_header
                %s196 = sphi 0, %s200
                %p197 = scmp.ge.s32.totalorder %s196, 1
                %s201 = sphi %s190, %s190
                %s202 = sphi %s187, %s187
              $region43: #{mlp_classifier.1} parent=39 // loop_header_branch
                %199 = sbr.rel (%p197) target = $region47
              $region44: #{mlp_classifier.1} parent=39 // loop_body
                %v203 = vld [vmem:[%s201] sm:$0xff]
                %204 = vst [vmem:[%s202] sm:$0xff] %v203
                %v205 = vld [vmem:[%s201 + $0x8] sm:$0xff]
                %206 = vst [vmem:[%s202 + $0x8] sm:$0xff] %v205
                %v207 = vld [vmem:[%s201 + $0x20] sm:$0xff]
                %208 = vst [vmem:[%s202 + $0x10] sm:$0xff] %v207
                %v209 = vld [vmem:[%s201 + $0x28] sm:$0xff]
                %210 = vst [vmem:[%s202 + $0x18] sm:$0xff] %v209
                %v211 = vld [vmem:[%s201 + $0x40] sm:$0xff]
                %212 = vst [vmem:[%s202 + $0x20] sm:$0xff] %v211
                %v213 = vld [vmem:[%s201 + $0x48] sm:$0xff]
                %214 = vst [vmem:[%s202 + $0x28] sm:$0xff] %v213
                %v215 = vld [vmem:[%s201 + $0x60] sm:$0xff]
                %216 = vst [vmem:[%s202 + $0x30] sm:$0xff] %v215
                %v217 = vld [vmem:[%s201 + $0x68] sm:$0xff]
                %218 = vst [vmem:[%s202 + $0x38] sm:$0xff] %v217
              $region45: #{mlp_classifier.1} parent=39 // loop_footer
                %s200 = sadd.s32 1, %s196
              $region46: #{mlp_classifier.1} parent=39 // loop_footer_branch
                %195 = sbr.rel target = $region42
              $region47: #{mlp_classifier.1} parent=39 // loop_exit
                _
            $region40: #{mlp_classifier.1} parent=35 // pred_fallthru
              _
            // Predicated region
            $region48: #{mlp_classifier.1} parent=35 // pred_check
              _
            $region49: #{mlp_classifier.1} parent=35 // pred_check_branch
              %220 = sbr.rel target = $region51
            $region50: #{mlp_classifier.1} parent=35 // pred_region
              _
            $region51: #{mlp_classifier.1} parent=35 // pred_fallthru
              _
          $region36: #{mlp_classifier.1} parent=31 // pred_fallthru
            _
          %221 = vnop
        $region32: #{mlp_classifier.1} parent=27 // pred_fallthru
          _
        // Predicated region
        $region52: #{mlp_classifier.1} parent=27 // pred_check
          %p222 = pneg %p100
        $region53: #{mlp_classifier.1} parent=27 // pred_check_branch
          %224 = sbr.rel (%p222) target = $region55
        $region54: #{mlp_classifier.1} parent=27 // pred_region
          %p225 = scmp.lt.s32.totalorder %s12, 1
          %s226 = scalar_select %p225, %s12, 1
          %s227 = smul.addr %s226, 8
          %s228 = scalar_lea.vmem %s3, %s227
        $region55: #{mlp_classifier.1} parent=27 // pred_fallthru
          _
      $region28: #{mlp_classifier.1} parent=5 // pred_fallthru
        _
      %p229 = scmp.le.s32.totalorder 1, %s12
      %p230 = scmp.lt.s32.totalorder %s12, 3
      %p231 = pnand %p229, %p230
      %p232 = pneg %p231
      // Predicated region
      $region56: #{mlp_classifier.1} parent=5 // pred_check
        _
      $region57: #{mlp_classifier.1} parent=5 // pred_check_branch
        %234 = sbr.rel (%p231) target = $region59
      $region58: #{mlp_classifier.1} parent=5 // pred_region
        %s235 = ssub.s32 %s12, 1
        %s236 = sand.u32 %s25, 1
        %s237 = sand.u32 %s25, 1
        %s238 = smul.addr %s237, 64
        %s239 = scalar_lea.vmem [#allocation3], %s238
        // Predicated region
        $region60: #{mlp_classifier.1} parent=58 // pred_check
          %p240 = pneg %p38
        $region61: #{mlp_classifier.1} parent=58 // pred_check_branch
          %242 = sbr.rel (%p240) target = $region63
        $region62: #{mlp_classifier.1} parent=58 // pred_region
          _
        $region63: #{mlp_classifier.1} parent=58 // pred_fallthru
          _
        %s243 = sand.u32 %s25, 1
        %s244 = sand.u32 %s25, 1
        %s245 = smul.addr %s244, 64
        %s246 = scalar_lea.vmem [#allocation3], %s245
        %p247 = pneg %p38
        %p248 = pneg %p35
        %p249 = pneg %p59
        %p250 = pneg %p56
        %p251 = pneg %p80
        %p252 = pneg %p77
        %p253 = scmp.lt.s32.totalorder %s17, 1
        %s254 = scalar_select %p253, %s17, 1
        %s255 = smul.addr %s254, 8
        %s256 = scalar_lea.vmem %s3, %s255
        %p257 = pneg %p106
        %p258 = pneg %p103
        %p259 = pneg %p127
        %p260 = pneg %p124
        %p261 = pneg %p153
        %p262 = pneg %p150
        %s263 = sand.u32 %s140, 1
        %s264 = sand.u32 %s140, 1
        %s265 = smul.addr %s264, 32
        %s266 = scalar_lea.vmem [#allocation4], %s265
        %p267 = scmp.lt.s32.totalorder %s17, 1
        %s268 = scalar_select %p267, %s17, 1
        %s269 = smul.addr %s268, 8
        %s270 = scalar_lea.vmem %s3, %s269
        %v272 = vld [vmem:[%s239] sm:$0xff]
        %v273 = vld [vmem:[%s239 + $0x8] sm:$0xff]
        %v274 = vld [vmem:[%s239 + $0x10] sm:$0xff]
        %v275 = vld [vmem:[%s239 + $0x18] sm:$0xff]
        %v276 = vld [vmem:[%s239 + $0x20] sm:$0xff]
        %v277 = vld [vmem:[%s239 + $0x28] sm:$0xff]
        %v278 = vld [vmem:[%s239 + $0x30] sm:$0xff]
        %v279 = vld [vmem:[%s239 + $0x38] sm:$0xff]
        %v280 = vpack.c.bf16 %v274, %v272
        %v281 = vpack.c.bf16 %v275, %v273
        %v282 = vpack.c.bf16 %v278, %v276
        %v283 = vpack.c.bf16 %v279, %v277
        %v284 = vld [vmem:[%s1] sm:$0xf]
        %v285 = vld [vmem:[%s1 + $0x4] sm:$0xf]
        %v286 = vld [vmem:[%s1 + $0x8] sm:$0xf]
        %v287 = vld [vmem:[%s1 + $0xc] sm:$0xf]
        %v288 = vld [vmem:[%s1 + $0x10] sm:$0xf]
        %v289 = vld [vmem:[%s1 + $0x14] sm:$0xf]
        %v290 = vld [vmem:[%s1 + $0x18] sm:$0xf]
        %v291 = vld [vmem:[%s1 + $0x1c] sm:$0xf]
        %v292 = vld [vmem:[%s1 + $0x20] sm:$0xf]
        %v293 = vld [vmem:[%s1 + $0x24] sm:$0xf]
        %v294 = vld [vmem:[%s1 + $0x28] sm:$0xf]
        %v295 = vld [vmem:[%s1 + $0x2c] sm:$0xf]
        %v296 = vld [vmem:[%s1 + $0x30] sm:$0xf]
        %v297 = vld [vmem:[%s1 + $0x34] sm:$0xf]
        %v298 = vld [vmem:[%s1 + $0x38] sm:$0xf]
        %v299 = vld [vmem:[%s1 + $0x3c] sm:$0xf]
        %v300 = vld [vmem:[%s1 + $0x40] sm:$0xf]
        %v301 = vld [vmem:[%s1 + $0x44] sm:$0xf]
        %v302 = vld [vmem:[%s1 + $0x48] sm:$0xf]
        %v303 = vld [vmem:[%s1 + $0x4c] sm:$0xf]
        %v304 = vld [vmem:[%s1 + $0x50] sm:$0xf]
        %v305 = vld [vmem:[%s1 + $0x54] sm:$0xf]
        %v306 = vld [vmem:[%s1 + $0x58] sm:$0xf]
        %v307 = vld [vmem:[%s1 + $0x5c] sm:$0xf]
        %v308 = vld [vmem:[%s1 + $0x60] sm:$0xf]
        %v309 = vld [vmem:[%s1 + $0x64] sm:$0xf]
        %v310 = vld [vmem:[%s1 + $0x68] sm:$0xf]
        %v311 = vld [vmem:[%s1 + $0x6c] sm:$0xf]
        %v312 = vld [vmem:[%s1 + $0x70] sm:$0xf]
        %v313 = vld [vmem:[%s1 + $0x74] sm:$0xf]
        %v314 = vld [vmem:[%s1 + $0x78] sm:$0xf]
        %v315 = vld [vmem:[%s1 + $0x7c] sm:$0xf]
        %v316 = vld [vmem:[%s2] sm:$0x1]
        %v317 = vlaneseq
        %v318 = vshrl.u32 %v317, 7
        %v319 = vsub.s32 0, %v318
        %v320 = vrot.slane %v316, %v319
        %v353 = vunpack.c.l.b16 %v284
        %v354 = vunpack.c.l.b16 %v285
        %v355 = vunpack.c.l.b16 %v286
        %v356 = vunpack.c.l.b16 %v287
        %v357 = vunpack.c.l.b16 %v288
        %v358 = vunpack.c.l.b16 %v289
        %v359 = vunpack.c.l.b16 %v290
        %v360 = vunpack.c.l.b16 %v291
        %v361 = vunpack.c.l.b16 %v292
        %v362 = vunpack.c.l.b16 %v293
        %v363 = vunpack.c.l.b16 %v294
        %v364 = vunpack.c.l.b16 %v295
        %v365 = vunpack.c.l.b16 %v296
        %v366 = vunpack.c.l.b16 %v297
        %v367 = vunpack.c.l.b16 %v298
        %v368 = vunpack.c.l.b16 %v299
        %v369 = vunpack.c.l.b16 %v300
        %v370 = vunpack.c.l.b16 %v301
        %v371 = vunpack.c.l.b16 %v302
        %v372 = vunpack.c.l.b16 %v303
        %v373 = vunpack.c.l.b16 %v304
        %v374 = vunpack.c.l.b16 %v305
        %v375 = vunpack.c.l.b16 %v306
        %v376 = vunpack.c.l.b16 %v307
        %v377 = vunpack.c.l.b16 %v308
        %v378 = vunpack.c.l.b16 %v309
        %v379 = vunpack.c.l.b16 %v310
        %v380 = vunpack.c.l.b16 %v311
        %v381 = vunpack.c.l.b16 %v312
        %v382 = vunpack.c.l.b16 %v313
        %v383 = vunpack.c.l.b16 %v314
        %v384 = vunpack.c.l.b16 %v315
        %v385 = vpack.c.b16 %v354, %v353
        %v386 = vpack.c.b16 %v356, %v355
        %v387 = vpack.c.b16 %v358, %v357
        %v388 = vpack.c.b16 %v360, %v359
        %v389 = vpack.c.b16 %v362, %v361
        %v390 = vpack.c.b16 %v364, %v363
        %v391 = vpack.c.b16 %v366, %v365
        %v392 = vpack.c.b16 %v368, %v367
        %v393 = vpack.c.b16 %v370, %v369
        %v394 = vpack.c.b16 %v372, %v371
        %v395 = vpack.c.b16 %v374, %v373
        %v396 = vpack.c.b16 %v376, %v375
        %v397 = vpack.c.b16 %v378, %v377
        %v398 = vpack.c.b16 %v380, %v379
        %v399 = vpack.c.b16 %v382, %v381
        %v400 = vpack.c.b16 %v384, %v383
        %417 = vmatprep.subr.bf16.mxu0 0
        %418 = vmatpush1.bf16.msra.mxu0 %v385
        %419 = vmatprep.subr.bf16.mxu0 0
        %420 = vmatpush1.bf16.msra.mxu0 %v386
        %421 = vmatprep.subr.bf16.mxu0 0
        %422 = vmatpush1.bf16.msra.mxu0 %v387
        %423 = vmatprep.subr.bf16.mxu0 0
        %424 = vmatpush1.bf16.msra.mxu0 %v388
        %425 = vmatprep.subr.bf16.mxu0 0
        %426 = vmatpush1.bf16.msra.mxu0 %v389
        %427 = vmatprep.subr.bf16.mxu0 0
        %428 = vmatpush1.bf16.msra.mxu0 %v390
        %429 = vmatprep.subr.bf16.mxu0 0
        %430 = vmatpush1.bf16.msra.mxu0 %v391
        %431 = vmatprep.subr.bf16.mxu0 0
        %432 = vmatpush1.bf16.msra.mxu0 %v392
        %433 = vmatprep.subr.bf16.mxu0 0
        %434 = vmatpush1.bf16.msra.mxu0 %v393
        %435 = vmatprep.subr.bf16.mxu0 0
        %436 = vmatpush1.bf16.msra.mxu0 %v394
        %437 = vmatprep.subr.bf16.mxu0 0
        %438 = vmatpush1.bf16.msra.mxu0 %v395
        %439 = vmatprep.subr.bf16.mxu0 0
        %440 = vmatpush1.bf16.msra.mxu0 %v396
        %441 = vmatprep.subr.bf16.mxu0 0
        %442 = vmatpush1.bf16.msra.mxu0 %v397
        %443 = vmatprep.subr.bf16.mxu0 0
        %444 = vmatpush1.bf16.msra.mxu0 %v398
        %445 = vmatprep.subr.bf16.mxu0 0
        %446 = vmatpush1.bf16.msra.mxu0 %v399
        %447 = vmatprep.subr.bf16.mxu0 0
        %448 = vmatpush1.bf16.msra.mxu0 %v400
        %449 = vmatprep.mubr.bf16.mxu0 %v281
        %450 = vmatmul.mubr.bf16.gmra.mrb[0].mxu0 %v280
        %v451 = vpop.f32.mrb[0].mxu0
        %v452 = vadd.f32 %v320, %v451
        %v453 = vpop.f32.mrb[0].mxu0
        %v454 = vpop.f32.mrb[0].mxu0
        %v455 = vadd.f32 %v320, %v454
        %v456 = vpop.f32.mrb[0].mxu0
        %457 = vmatprep.mubr.bf16.mxu0 %v283
        %458 = vmatmul.mubr.bf16.gmra.mrb[0].mxu0 %v282
        %v459 = vpop.f32.mrb[0].mxu0
        %v460 = vadd.f32 %v320, %v459
        %v461 = vpop.f32.mrb[0].mxu0
        %v462 = vpop.f32.mrb[0].mxu0
        %v463 = vadd.f32 %v320, %v462
        %v464 = vpop.f32.mrb[0].mxu0
        %465 = vdwg.mxu0
        %v466 = vadd.f32 %v452, %v455
        %v467 = vadd.f32 %v466, %v460
        %v468 = vadd.f32 %v467, %v463
        %469 = vadd.xlane.f32.xlu0 %v468
        %v470 = vpop.xlane.xlu0 %469
        %v471 = vrcp.pop 512.0
        %v472 = vmul.f32 %v470, %v471
        %v473 = vsub.f32 %v452, %v472
        %v474 = vsub.f32 %v455, %v472
        %v475 = vsub.f32 %v460, %v472
        %v476 = vsub.f32 %v463, %v472
        %v477 = vmul.f32 %v473, %v473
        %v478 = vmul.f32 %v474, %v474
        %v479 = vmul.f32 %v475, %v475
        %v480 = vmul.f32 %v476, %v476
        %v481 = vadd.f32 %v477, %v478
        %v482 = vadd.f32 %v481, %v479
        %v483 = vadd.f32 %v482, %v480
        %484 = vadd.xlane.f32.xlu0 %v483
        %v485 = vpop.xlane.xlu0 %484
        %v486 = vmul.f32 %v485, %v471
        %v487 = vadd.f32 %v486, 1e-05
        %v488 = vrsqrt.pop %v487
        %v489 = vld [vmem:[%s270] sm:$0xff]
        %v490 = vmul.f32 %v489, %v488
        %492 = vset.pattern.permute.xlu0 0
        %493 = vperm.xlu0 %492, %v490
        %v494 = vpop.permute.xlu0 %493
        %v496 = vmul.f32 %v473, %v494
        %v497 = vmul.f32 %v474, %v494
        %v498 = vmul.f32 %v475, %v494
        %v499 = vmul.f32 %v476, %v494
        %501 = vset.pattern.permute.xlu0 1
        %502 = vperm.xlu0 %501, %v489
        %v503 = vpop.permute.xlu0 %502
        %v505 = vadd.f32 %v496, %v503
        %v506 = vadd.f32 %v497, %v503
        %v507 = vadd.f32 %v498, %v503
        %v508 = vadd.f32 %v499, %v503
        %v509 = vmax.f32 %v505, 0.0
        %v510 = vmax.f32 %v506, 0.0
        %v511 = vmax.f32 %v507, 0.0
        %v512 = vmax.f32 %v508, 0.0
        %v513 = vxor.u32 %v509, 2147483648
        %v514 = vxor.u32 %v510, 2147483648
        %v515 = vxor.u32 %v511, 2147483648
        %v516 = vxor.u32 %v512, 2147483648
        %v517 = vmul.f32 %v513, 1.442695
        %v518 = vpow.pop %v517
        %v519 = vmul.f32 %v514, 1.442695
        %v520 = vpow.pop %v519
        %v521 = vmul.f32 %v515, 1.442695
        %v522 = vpow.pop %v521
        %v523 = vmul.f32 %v516, 1.442695
        %v524 = vpow.pop %v523
        %v525 = vadd.f32 %v518, 1.0
        %v526 = vadd.f32 %v520, 1.0
        %v527 = vadd.f32 %v522, 1.0
        %v528 = vadd.f32 %v524, 1.0
        %v529 = vrcp.pop %v525
        %v530 = vmul.f32 1.0, %v529
        %v531 = vrcp.pop %v526
        %v532 = vmul.f32 1.0, %v531
        %v533 = vrcp.pop %v527
        %v534 = vmul.f32 1.0, %v533
        %v535 = vrcp.pop %v528
        %v536 = vmul.f32 1.0, %v535
        %v537 = vld [vmem:[%s2 + $0x1] sm:$0x1]
        %v538 = vlaneseq
        %v539 = vshrl.u32 %v538, 7
        %v540 = vsub.s32 0, %v539
        %v541 = vrot.slane %v537, %v540
        %v542 = vmul.f32 %v530, %v541
        %v543 = vmul.f32 %v532, %v541
        %v544 = vmul.f32 %v534, %v541
        %v545 = vmul.f32 %v536, %v541
        %546 = vadd.xlane.f32.xlu0 %v542
        %v547 = vpop.xlane.xlu0 %546
        %548 = vadd.xlane.f32.xlu0 %v543
        %v549 = vpop.xlane.xlu0 %548
        %550 = vadd.xlane.f32.xlu0 %v544
        %v551 = vpop.xlane.xlu0 %550
        %552 = vadd.xlane.f32.xlu0 %v545
        %v553 = vpop.xlane.xlu0 %552
        %s554 = sld [smem:[#allocation2]]
        %v555 = vstv %s554
        %v556 = vadd.f32 %v547, %v555
        %v557 = vadd.f32 %v549, %v555
        %v558 = vadd.f32 %v551, %v555
        %v559 = vadd.f32 %v553, %v555
        %vm560 = vcmask 7168
        %561 = vst.msk [vmem:[%s266] sm:$0xff] %vm560, %v556
        %562 = vst.msk [vmem:[%s266 + $0x8] sm:$0xff] %vm560, %v557
        %563 = vst.msk [vmem:[%s266 + $0x10] sm:$0xff] %vm560, %v558
        %564 = vst.msk [vmem:[%s266 + $0x18] sm:$0xff] %vm560, %v559
        %s565 = sand.u32 %s140, 1
        %s566 = sand.u32 %s140, 1
        %s567 = smul.addr %s566, 32
        %s568 = scalar_lea.vmem [#allocation4], %s567
        // Predicated region
        $region64: #{mlp_classifier.1} parent=58 // pred_check
          %p569 = pneg %p150
        $region65: #{mlp_classifier.1} parent=58 // pred_check_branch
          %571 = sbr.rel (%p569) target = $region67
        $region66: #{mlp_classifier.1} parent=58 // pred_region
          %s572 = smul.addr %s17, 8
          %s573 = scalar_lea.vmem %s5, %s572
          // Predicated region
          $region68: #{mlp_classifier.1} parent=66 // pred_check
            _
          $region69: #{mlp_classifier.1} parent=66 // pred_check_branch
            %575 = sbr.rel (0) target = $region71
          $region70: #{mlp_classifier.1} parent=66 // pred_region
            // Predicated region
            $region72: #{mlp_classifier.1} parent=70 // pred_check
              _
            $region73: #{mlp_classifier.1} parent=70 // pred_check_branch
              %577 = sbr.rel (0) target = $region75
            $region74: #{mlp_classifier.1} parent=70 // pred_region
              // Predicated region
              $region87: #{mlp_classifier.1} parent=74 // pred_check
                _
              $region88: #{mlp_classifier.1} parent=74 // pred_check_branch
                %598 = sbr.rel (0) target = $region90
              $region89: #{mlp_classifier.1} parent=74 // pred_region
                loop: start=0, step=1, limit=1
                $region91: #{mlp_classifier.1} parent=89 // loop_pre_header
                  _
                $region92: #{mlp_classifier.1} parent=89 // loop_header
                  %s600 = sphi 0, %s604
                  %p601 = scmp.ge.s32.totalorder %s600, 1
                  %s605 = sphi %s568, %s568
                  %s606 = sphi %s573, %s573
                $region93: #{mlp_classifier.1} parent=89 // loop_header_branch
                  %603 = sbr.rel (%p601) target = $region97
                $region94: #{mlp_classifier.1} parent=89 // loop_body
                  %v607 = vld [vmem:[%s605] sm:$0xff]
                  %608 = vst [vmem:[%s606] sm:$0xff] %v607
                  %v609 = vld [vmem:[%s605 + $0x8] sm:$0xff]
                  %610 = vst [vmem:[%s606 + $0x10] sm:$0xff] %v609
                  %v611 = vld [vmem:[%s605 + $0x10] sm:$0xff]
                  %612 = vst [vmem:[%s606 + $0x20] sm:$0xff] %v611
                  %v613 = vld [vmem:[%s605 + $0x18] sm:$0xff]
                  %614 = vst [vmem:[%s606 + $0x30] sm:$0xff] %v613
                $region95: #{mlp_classifier.1} parent=89 // loop_footer
                  %s604 = sadd.s32 1, %s600
                $region96: #{mlp_classifier.1} parent=89 // loop_footer_branch
                  %599 = sbr.rel target = $region92
                $region97: #{mlp_classifier.1} parent=89 // loop_exit
                  _
              $region90: #{mlp_classifier.1} parent=74 // pred_fallthru
                _
              // Predicated region
              $region98: #{mlp_classifier.1} parent=74 // pred_check
                _
              $region99: #{mlp_classifier.1} parent=74 // pred_check_branch
                %616 = sbr.rel target = $region101
              $region100: #{mlp_classifier.1} parent=74 // pred_region
                _
              $region101: #{mlp_classifier.1} parent=74 // pred_fallthru
                _
            $region75: #{mlp_classifier.1} parent=70 // pred_fallthru
              _
            // Predicated region
            $region76: #{mlp_classifier.1} parent=70 // pred_check
              _
            $region77: #{mlp_classifier.1} parent=70 // pred_check_branch
              %579 = sbr.rel target = $region79
            $region78: #{mlp_classifier.1} parent=70 // pred_region
              loop: start=0, step=1, limit=1
              $region80: #{mlp_classifier.1} parent=78 // loop_pre_header
                _
              $region81: #{mlp_classifier.1} parent=78 // loop_header
                %s582 = sphi 0, %s586
                %p583 = scmp.ge.s32.totalorder %s582, 1
                %s587 = sphi %s568, %s568
                %s588 = sphi %s573, %s573
              $region82: #{mlp_classifier.1} parent=78 // loop_header_branch
                %585 = sbr.rel (%p583) target = $region86
              $region83: #{mlp_classifier.1} parent=78 // loop_body
                %v589 = vld [vmem:[%s587] sm:$0xff]
                %590 = vst [vmem:[%s588] sm:$0xff] %v589
                %v591 = vld [vmem:[%s587 + $0x8] sm:$0xff]
                %592 = vst [vmem:[%s588 + $0x10] sm:$0xff] %v591
                %v593 = vld [vmem:[%s587 + $0x10] sm:$0xff]
                %594 = vst [vmem:[%s588 + $0x20] sm:$0xff] %v593
                %v595 = vld [vmem:[%s587 + $0x18] sm:$0xff]
                %596 = vst [vmem:[%s588 + $0x30] sm:$0xff] %v595
              $region84: #{mlp_classifier.1} parent=78 // loop_footer
                %s586 = sadd.s32 1, %s582
              $region85: #{mlp_classifier.1} parent=78 // loop_footer_branch
                %581 = sbr.rel target = $region81
              $region86: #{mlp_classifier.1} parent=78 // loop_exit
                _
            $region79: #{mlp_classifier.1} parent=70 // pred_fallthru
              _
          $region71: #{mlp_classifier.1} parent=66 // pred_fallthru
            _
          %617 = vnop
        $region67: #{mlp_classifier.1} parent=58 // pred_fallthru
          _
      $region59: #{mlp_classifier.1} parent=5 // pred_fallthru
        _
      %p618 = scmp.le.s32.totalorder 2, %s12
      // Predicated region
      $region102: #{mlp_classifier.1} parent=5 // pred_check
        %p619 = pneg %p618
      $region103: #{mlp_classifier.1} parent=5 // pred_check_branch
        %621 = sbr.rel (%p619) target = $region105
      $region104: #{mlp_classifier.1} parent=5 // pred_region
        %s622 = ssub.s32 %s12, 2
        // Predicated region
        $region106: #{mlp_classifier.1} parent=104 // pred_check
          %p623 = pneg %p156
        $region107: #{mlp_classifier.1} parent=104 // pred_check_branch
          %625 = sbr.rel (%p623) target = $region109
        $region108: #{mlp_classifier.1} parent=104 // pred_region
          %s626 = sand.u32 %s141, 1
          %s627 = sand.u32 %s141, 1
          %s628 = smul.addr %s627, 32
          %s629 = scalar_lea.vmem [#allocation4], %s628
        $region109: #{mlp_classifier.1} parent=104 // pred_fallthru
          _
      $region105: #{mlp_classifier.1} parent=5 // pred_fallthru
        _
    $region6: #{mlp_classifier.1} parent=1 // loop_footer
      %s16 = sadd.s32 1, %s12
    $region7: #{mlp_classifier.1} parent=1 // loop_footer_branch
      %11 = sbr.rel target = $region3
    $region8: #{mlp_classifier.1} parent=1 // loop_exit
      _

</llo_original>
